<compile_context>
chip_gen: v7x
topology: tpu7x:2x2x1
jax: 0.10.0
libtpu: 0.0.40
codegen_flags: <defaults>
</compile_context>

<pallas_src>
import functools

import jax
import jax.numpy as jnp
from jax.experimental import pallas as pl
from jax.experimental.pallas import tpu as pltpu


def ensemble_kernel(x_ref, w_ref, o_ref, *, num_models, cpad):
    """Fused matmul -> per-model softmax -> ensemble sum for one batch tile.

    x_ref : (TB, D+1)     bf16 VMEM   (last column is ones -> folded bias)
    w_ref : (D+1, M*Cp)   bf16 VMEM   (per-model weight slabs stacked on lanes,
                                       last row is the bias)
    o_ref : (TB, Cp)      f32  VMEM
    """
    # One lane-dense MXU matmul covering all ensemble members at once,
    # accumulated in f32.
    logits = jnp.dot(
        x_ref[...], w_ref[...], preferred_element_type=jnp.float32
    )                                                      # (TB, M*Cp) f32

    acc = jnp.zeros(o_ref.shape, jnp.float32)
    for m in range(num_models):                            # M is tiny; fully unrolled
        # Static, 128-aligned lane slice of model m's logits.
        lm = logits[:, m * cpad:(m + 1) * cpad]            # (TB, Cp)
        # softmax over the class axis (== PyTorch dim=1 of the (B, C) output)
        mx = jnp.max(lm, axis=-1, keepdims=True)
        ex = jnp.exp(lm - mx)
        denom = jnp.sum(ex, axis=-1, keepdims=True)
        acc = acc + ex * pl.reciprocal(denom)              # exact reciprocal
    o_ref[...] = acc.astype(o_ref.dtype)


def _round_up(v, m):
    return ((v + m - 1) // m) * m


def prepare_ensemble_params(weights, biases):
    """One-time packing of ensemble parameters (call once at construction).

    weights: (M, D, C) f32,  biases: (M, C) f32
    returns: w_aug (D+1, M*Cp) bf16 with the bias folded in as the last K row
             and the class axis padded to a multiple of 128 (padded classes get
             a -1e30 bias so softmax assigns them zero probability).
    """
    M, D, C = weights.shape
    Cp = _round_up(C, 128)
    if Cp != C:
        weights = jnp.pad(weights, ((0, 0), (0, 0), (0, Cp - C)))
        biases = jnp.pad(biases, ((0, 0), (0, Cp - C)), constant_values=-1e30)
    # Stack the M weight slabs along the class/lane axis: (D, M*Cp).
    w_flat = jnp.transpose(weights, (1, 0, 2)).reshape(D, M * Cp)
    b_flat = biases.reshape(1, M * Cp)
    # Fold the bias in as an extra K row; cast to bf16 for the MXU / halved DMA.
    w_aug = jnp.concatenate([w_flat, b_flat], axis=0).astype(jnp.bfloat16)
    return w_aug


@functools.partial(jax.jit, static_argnames=("num_models", "num_classes"))
def ensemble_avg_forward(x, w_aug, *, num_models, num_classes):
    """x: (B, D) f32, w_aug: (D+1, M*Cp) bf16 -> (B, C) f32 (sum of M softmaxes)."""
    B, D = x.shape
    Daug, MCp = w_aug.shape
    Cp = MCp // num_models

    # Per-call prep (jitted, fuses with the pallas call's operands):
    # append the ones column for the folded bias and cast to bf16.
    x_aug = jnp.pad(x, ((0, 0), (0, 1)), constant_values=1.0).astype(jnp.bfloat16)

    # Batch tile: whole batch when small; 128-row tiles otherwise so v7x can
    # shard the parallel grid axis across both TensorCores.
    TB = B if B <= 128 else 128
    grid = (pl.cdiv(B, TB),)
    # NOTE: at these sizes everything fits in VMEM with huge margin on
    # v5e/v6e/v7x; if D or M*Cp ever grows near the v7x 32 MiB scoped budget,
    # tile the lane axis of w_aug as well and raise vmem_limit_bytes.

    out = pl.pallas_call(
        functools.partial(ensemble_kernel, num_models=num_models, cpad=Cp),
        out_shape=jax.ShapeDtypeStruct((B, Cp), jnp.float32),
        grid=grid,
        in_specs=[
            pl.BlockSpec((TB, Daug), lambda i: (i, 0)),    # x tile
            pl.BlockSpec((Daug, MCp), lambda i: (0, 0)),   # W resident across steps
        ],
        out_specs=pl.BlockSpec((TB, Cp), lambda i: (i, 0)),
        compiler_params=pltpu.CompilerParams(
            dimension_semantics=("parallel",)),
    )(x_aug, w_aug)

    if Cp != num_classes:                                  # drop padded classes
        out = out[:, :num_classes]
    return out


def reference_forward(x, weights, biases):
    """Pure-JAX f32 reference mirroring the PyTorch forward (sum of softmaxes)."""
    out = None
    for m in range(weights.shape[0]):
        logits = x @ weights[m] + biases[m]
        p = jax.nn.softmax(logits, axis=1)
        out = p if out is None else out + p
    return out


if __name__ == "__main__":
    # Small, deterministic problem: batch=8, features=32, classes=128, 3 models.
    B, D, C, M = 8, 32, 128, 3

    key = jax.random.PRNGKey(0)
    kx, kw, kb = jax.random.split(key, 3)
    x = jax.random.normal(kx, (B, D), dtype=jnp.float32)
    weights = jax.random.normal(kw, (M, D, C), dtype=jnp.float32) * 0.1
    biases = jax.random.normal(kb, (M, C), dtype=jnp.float32) * 0.1

    # One-time parameter packing (hoisted out of the per-call hot path).
    w_aug = prepare_ensemble_params(weights, biases)
    w_aug = jax.block_until_ready(w_aug)

    out = ensemble_avg_forward(x, w_aug, num_models=M, num_classes=C)
    out = jax.block_until_ready(out)

    ref = reference_forward(x, weights, biases)
    assert out.shape == (B, C)
    # bf16 MXU operands (f32 accumulation) -> slightly loosened tolerance.
    assert jnp.allclose(out, ref, atol=5e-3, rtol=5e-3), "mismatch vs reference"
    # sanity: each softmax sums to 1, so the ensemble SUM of M softmaxes sums to M per row
    # (the PyTorch module sums, it does not divide by M despite its name).
    assert jnp.allclose(jnp.sum(out, axis=1), jnp.full((B,), float(M)), atol=1e-3)

    print("KERNEL_OK")
</pallas_src>

<mosaic_0001>
module attributes {stable_mosaic.version = 11 : i64} {
  func.func @ensemble_kernel(%arg0: i32, %arg1: memref<8x33xbf16, #tpu.memory_space<vmem>>, %arg2: memref<33x384xbf16, #tpu.memory_space<vmem>>, %arg3: memref<8x128xf32, #tpu.memory_space<vmem>>) attributes {dimension_semantics = [#tpu.dimension_semantics<parallel>], iteration_bounds = array<i64: 1>, scalar_prefetch = 0 : i64, scratch_operands = 0 : i64, tpu.core_type = #tpu.core_type<tc>, window_params = [{transform_indices = @transform_0, window_bounds = array<i64: 8, 33>}, {pipeline_mode = #tpu.pipeline_mode<synchronous>, transform_indices = @transform_1, window_bounds = array<i64: 33, 384>}, {transform_indices = @transform_2, window_bounds = array<i64: 8, 128>}]} {
    %c0 = arith.constant 0 : index
    %c0_0 = arith.constant 0 : index
    %0 = vector.load %arg1[%c0, %c0_0] : memref<8x33xbf16, #tpu.memory_space<vmem>>, vector<8x33xbf16>
    %c0_1 = arith.constant 0 : index
    %c0_2 = arith.constant 0 : index
    %1 = vector.load %arg2[%c0_1, %c0_2] : memref<33x384xbf16, #tpu.memory_space<vmem>>, vector<33x384xbf16>
    %cst = arith.constant dense<0.000000e+00> : vector<8x384xf32>
    %2 = tpu.matmul %0, %1, %cst {dimension_numbers = #tpu.dot_dimension_numbers<[1], [0], [0], [1], [0, 0, 1, 1], [], []>} : vector<8x33xbf16>, vector<33x384xbf16>, vector<8x384xf32> -> vector<8x384xf32>
    %cst_3 = arith.constant 0.000000e+00 : f32
    %3 = vector.broadcast %cst_3 : f32 to vector<8x128xf32>
    %4 = vector.extract_strided_slice %2 {offsets = [0, 0], sizes = [8, 128], strides = [1, 1]} : vector<8x384xf32> to vector<8x128xf32>
    %cst_4 = arith.constant dense<0xFF800000> : vector<8xf32>
    %5 = vector.multi_reduction <maximumf>, %4, %cst_4 [1] : vector<8x128xf32> to vector<8xf32>
    %6 = vector.shape_cast %5 : vector<8xf32> to vector<8x1xf32>
    %7 = vector.broadcast %6 : vector<8x1xf32> to vector<8x128xf32>
    %8 = arith.subf %4, %7 : vector<8x128xf32>
    %9 = math.exp %8 : vector<8x128xf32>
    %cst_5 = arith.constant dense<0.000000e+00> : vector<8xf32>
    %10 = vector.multi_reduction <add>, %9, %cst_5 [1] : vector<8x128xf32> to vector<8xf32>
    %11 = vector.shape_cast %10 : vector<8xf32> to vector<8x1xf32>
    %12 = tpu.reciprocal %11 : vector<8x1xf32> -> vector<8x1xf32>
    %13 = vector.broadcast %12 : vector<8x1xf32> to vector<8x128xf32>
    %14 = arith.mulf %9, %13 : vector<8x128xf32>
    %15 = arith.addf %3, %14 : vector<8x128xf32>
    %16 = vector.extract_strided_slice %2 {offsets = [0, 128], sizes = [8, 128], strides = [1, 1]} : vector<8x384xf32> to vector<8x128xf32>
    %cst_6 = arith.constant dense<0xFF800000> : vector<8xf32>
    %17 = vector.multi_reduction <maximumf>, %16, %cst_6 [1] : vector<8x128xf32> to vector<8xf32>
    %18 = vector.shape_cast %17 : vector<8xf32> to vector<8x1xf32>
    %19 = vector.broadcast %18 : vector<8x1xf32> to vector<8x128xf32>
    %20 = arith.subf %16, %19 : vector<8x128xf32>
    %21 = math.exp %20 : vector<8x128xf32>
    %cst_7 = arith.constant dense<0.000000e+00> : vector<8xf32>
    %22 = vector.multi_reduction <add>, %21, %cst_7 [1] : vector<8x128xf32> to vector<8xf32>
    %23 = vector.shape_cast %22 : vector<8xf32> to vector<8x1xf32>
    %24 = tpu.reciprocal %23 : vector<8x1xf32> -> vector<8x1xf32>
    %25 = vector.broadcast %24 : vector<8x1xf32> to vector<8x128xf32>
    %26 = arith.mulf %21, %25 : vector<8x128xf32>
    %27 = arith.addf %15, %26 : vector<8x128xf32>
    %28 = vector.extract_strided_slice %2 {offsets = [0, 256], sizes = [8, 128], strides = [1, 1]} : vector<8x384xf32> to vector<8x128xf32>
    %cst_8 = arith.constant dense<0xFF800000> : vector<8xf32>
    %29 = vector.multi_reduction <maximumf>, %28, %cst_8 [1] : vector<8x128xf32> to vector<8xf32>
    %30 = vector.shape_cast %29 : vector<8xf32> to vector<8x1xf32>
    %31 = vector.broadcast %30 : vector<8x1xf32> to vector<8x128xf32>
    %32 = arith.subf %28, %31 : vector<8x128xf32>
    %33 = math.exp %32 : vector<8x128xf32>
    %cst_9 = arith.constant dense<0.000000e+00> : vector<8xf32>
    %34 = vector.multi_reduction <add>, %33, %cst_9 [1] : vector<8x128xf32> to vector<8xf32>
    %35 = vector.shape_cast %34 : vector<8xf32> to vector<8x1xf32>
    %36 = tpu.reciprocal %35 : vector<8x1xf32> -> vector<8x1xf32>
    %37 = vector.broadcast %36 : vector<8x1xf32> to vector<8x128xf32>
    %38 = arith.mulf %33, %37 : vector<8x128xf32>
    %39 = arith.addf %27, %38 : vector<8x128xf32>
    %c0_10 = arith.constant 0 : index
    %c0_11 = arith.constant 0 : index
    %40 = vector.load %arg3[%c0_10, %c0_11] : memref<8x128xf32, #tpu.memory_space<vmem>>, vector<8x128xf32>
    tpu.vector_store %arg3[%c0_10, %c0_11], %39 {strides = array<i32>} : memref<8x128xf32, #tpu.memory_space<vmem>>, vector<8x128xf32>,
    return
  }
  func.func @transform_0(%arg0: i32) -> (i32, i32) {
    %c0_i32 = arith.constant 0 : i32
    %c0_i32_0 = arith.constant 0 : i32
    return %arg0, %c0_i32 : i32, i32
  }
  func.func @transform_1(%arg0: i32) -> (i32, i32) {
    %c0_i32 = arith.constant 0 : i32
    %c0_i32_0 = arith.constant 0 : i32
    %c0_i32_1 = arith.constant 0 : i32
    return %c0_i32, %c0_i32_0 : i32, i32
  }
  func.func @transform_2(%arg0: i32) -> (i32, i32) {
    %c0_i32 = arith.constant 0 : i32
    %c0_i32_0 = arith.constant 0 : i32
    return %arg0, %c0_i32 : i32, i32
  }
}

</mosaic_0001>

<llo_original>
// kernel: ensemble_avg_forward.1
$region0: #{ensemble_avg_forward.1}
  #allocation0 [shape = 'u32[]', space=smem, size = 0x4, offset = 0x4, fixed_abs, tag = 'smem constant byte address 0x4 - core index']
  #allocation1 [shape = 'u32[144,128]{1,0:T(1,128)}', space=vmem, size = 0x12000, scoped, tag = 'internal scratch']
  %s0 = inlined_call_operand.vmem [shape: bf16[8,33], index: 0, kind: input, shape index: {}]
  %s1 = inlined_call_operand.hbm [shape: bf16[33,384], index: 1, kind: input, shape index: {}]
  %s2 = inlined_call_operand.hbm [shape: f32[8,128], index: 2, kind: output, shape index: {}]
  %s3 = sld [smem:[#allocation0]]
  $region22: #{ensemble_avg_forward.1} parent=0
    _
  %s5 = ssub.s32 1, %s3
  %s6 = scalar_select 0, %s5, %s3
  $region1: #{ensemble_avg_forward.1} parent=0
    #allocation2 [shape = 'u8[30720]{0}', space=vmem, size = 0x7800, scoped, tag = 'input window, operand 1, single buffered']
    #allocation3 [shape = 's32[1]{0}', space=sflag, size = 0x4, scoped, tag = 'scoped memory for ensemble_avg_forward.1']
    #allocation4 [shape = 's32[1]{0}', space=sflag, size = 0x4, scoped, tag = 'scoped memory for ensemble_avg_forward.1']
    #allocation5 [shape = 'u8[4096]{0}', space=vmem, size = 0x1000, scoped, tag = 'output window, operand 0, single buffered']
    %7 = vsyncpa [#allocation3], 0
    %8 = vsyncpa [#allocation4], 0
    // Predicated region
    $region2: #{ensemble_avg_forward.1} parent=1 // pred_check
      _
    $region3: #{ensemble_avg_forward.1} parent=1 // pred_check_branch
      %10 = sbr.rel (0) target = $region5
    $region4: #{ensemble_avg_forward.1} parent=1 // pred_region
      _
    $region5: #{ensemble_avg_forward.1} parent=1 // pred_fallthru
      _
    // Predicated region
    $region6: #{ensemble_avg_forward.1} parent=1 // pred_check
      _
    $region7: #{ensemble_avg_forward.1} parent=1 // pred_check_branch
      %12 = sbr.rel (0) target = $region9
    $region8: #{ensemble_avg_forward.1} parent=1 // pred_region
      %s14 = ssub.s32 960, 960
      %15 = vsyncadd [#allocation3], %s14
      %s16 = sshll.u32 [#allocation2], 4
      %s17 = int_to_ptr.vmem [resolvable:$true] %s16
      %22 = dma.hbm_to_vmem [thread:$0]  %s1, 960, %s17, [#allocation3], 192, 192, 12
    $region9: #{ensemble_avg_forward.1} parent=1 // pred_fallthru
      _
    // Predicated region
    $region10: #{ensemble_avg_forward.1} parent=1 // pred_check
      _
    $region11: #{ensemble_avg_forward.1} parent=1 // pred_check_branch
      %24 = sbr.rel (0) target = $region13
    $region12: #{ensemble_avg_forward.1} parent=1 // pred_region
      %25 = dma.done [#allocation3], 960
    $region13: #{ensemble_avg_forward.1} parent=1 // pred_fallthru
      _
    %v27 = vld [vmem:[%s0] sm:$0xf]
    %v28 = vld [vmem:[#allocation2] sm:$0xff]
    %v29 = vld [vmem:[#allocation2 + $0x8] sm:$0xf]
    %v30 = vld [vmem:[#allocation2 + $0xc] sm:$0xff]
    %v31 = vld [vmem:[#allocation2 + $0x14] sm:$0xf]
    %v32 = vld [vmem:[#allocation2 + $0x18] sm:$0xff]
    %v33 = vld [vmem:[#allocation2 + $0x20] sm:$0xf]
    %v34 = vld [vmem:[#allocation2 + $0x24] sm:$0xff]
    %v35 = vld [vmem:[#allocation2 + $0x2c] sm:$0xf]
    %v36 = vld [vmem:[#allocation2 + $0x30] sm:$0x11]
    %v37 = vld [vmem:[#allocation2 + $0x38] sm:$0x1]
    %v48 = vunpack.c.l.b16 %v28
    %v49 = vunpack.c.h.b16 %v28
    %v50 = vunpack.c.l.b16 %v29
    %v51 = vunpack.c.l.b16 %v30
    %v52 = vunpack.c.h.b16 %v30
    %v53 = vunpack.c.l.b16 %v31
    %v54 = vunpack.c.l.b16 %v32
    %v55 = vunpack.c.h.b16 %v32
    %v56 = vunpack.c.l.b16 %v33
    %v57 = vunpack.c.l.b16 %v34
    %v58 = vunpack.c.h.b16 %v34
    %v59 = vunpack.c.l.b16 %v35
    %v60 = vunpack.c.l.b16 %v36
    %v61 = vunpack.c.h.b16 %v36
    %v62 = vunpack.c.l.b16 %v37
    %v63 = vpack.c.b16 %v51, %v48
    %v64 = vpack.c.b16 %v52, %v49
    %v65 = vpack.c.b16 %v53, %v50
    %v66 = vpack.c.b16 %v57, %v54
    %v67 = vpack.c.b16 %v58, %v55
    %v68 = vpack.c.b16 %v59, %v56
    %v69 = vpack.c.b16 %v60, %v60
    %v70 = vpack.c.b16 %v61, %v61
    %v71 = vpack.c.b16 %v62, %v62
    %vm78 = vcmask 269312
    %v80 = vsel %vm78, %v27, 0
    %vm82 = vcmask 1040384
    %v83 = vsel 0, 4294967295, 65535
    %v84 = vsel %vm82, %v83, 0
    %v86 = vand.u32 %v69, %v84
    %v89 = vand.u32 %v70, %v84
    %v92 = vand.u32 %v71, %v84
    %94 = vmatprep.subr.bf16.mxu0 %v64
    %95 = vmatpush1.bf16.msra.mxu0 %v63
    %96 = vmatprep.subr.bf16.mxu0 %v67
    %97 = vmatpush1.bf16.msra.mxu0 %v66
    %98 = vmatprep.subr.bf16.mxu0 %v89
    %99 = vmatpush1.bf16.msra.mxu0 %v86
    %100 = vmatprep.subr.bf16.mxu0 0
    %101 = vmatpush1.bf16.msra.mxu0 0
    %102 = vmatprep.subr.bf16.mxu0 0
    %103 = vmatpush1.bf16.msra.mxu0 0
    %104 = vmatprep.subr.bf16.mxu0 0
    %105 = vmatpush1.bf16.msra.mxu0 0
    %106 = vmatprep.subr.bf16.mxu0 0
    %107 = vmatpush1.bf16.msra.mxu0 0
    %108 = vmatprep.subr.bf16.mxu0 0
    %109 = vmatpush1.bf16.msra.mxu0 0
    %110 = vmatprep.subr.bf16.mxu0 0
    %111 = vmatpush1.bf16.msra.mxu0 0
    %112 = vmatprep.subr.bf16.mxu0 0
    %113 = vmatpush1.bf16.msra.mxu0 0
    %114 = vmatprep.subr.bf16.mxu0 0
    %115 = vmatpush1.bf16.msra.mxu0 0
    %116 = vmatprep.subr.bf16.mxu0 0
    %117 = vmatpush1.bf16.msra.mxu0 0
    %118 = vmatprep.subr.bf16.mxu0 0
    %119 = vmatpush1.bf16.msra.mxu0 0
    %120 = vmatprep.subr.bf16.mxu0 0
    %121 = vmatpush1.bf16.msra.mxu0 0
    %122 = vmatprep.subr.bf16.mxu0 0
    %123 = vmatpush1.bf16.msra.mxu0 0
    %124 = vmatprep.subr.bf16.mxu0 0
    %125 = vmatpush1.bf16.msra.mxu0 0
    %126 = vmatprep.mubr.bf16.mxu0 0
    %127 = vmatmul.mubr.bf16.gmra.mrb[0].mxu0 %v80
    %v128 = vpop.f32.mrb[0].mxu0
    %v129 = vadd.f32 0.0, %v128
    %v130 = vpop.f32.mrb[0].mxu0
    %v131 = vadd.f32 0.0, %v130
    %v132 = vpop.f32.mrb[0].mxu0
    %v133 = vpop.f32.mrb[0].mxu0
    %134 = vdwg.mxu0
    %135 = vmatprep.subr.bf16.mxu0 0
    %136 = vmatpush1.bf16.msra.mxu0 %v65
    %137 = vmatprep.subr.bf16.mxu0 0
    %138 = vmatpush1.bf16.msra.mxu0 %v68
    %139 = vmatprep.subr.bf16.mxu0 0
    %140 = vmatpush1.bf16.msra.mxu0 %v92
    %141 = vmatprep.subr.bf16.mxu0 0
    %142 = vmatpush1.bf16.msra.mxu0 0
    %143 = vmatprep.subr.bf16.mxu0 0
    %144 = vmatpush1.bf16.msra.mxu0 0
    %145 = vmatprep.subr.bf16.mxu0 0
    %146 = vmatpush1.bf16.msra.mxu0 0
    %147 = vmatprep.subr.bf16.mxu0 0
    %148 = vmatpush1.bf16.msra.mxu0 0
    %149 = vmatprep.subr.bf16.mxu0 0
    %150 = vmatpush1.bf16.msra.mxu0 0
    %151 = vmatprep.subr.bf16.mxu0 0
    %152 = vmatpush1.bf16.msra.mxu0 0
    %153 = vmatprep.subr.bf16.mxu0 0
    %154 = vmatpush1.bf16.msra.mxu0 0
    %155 = vmatprep.subr.bf16.mxu0 0
    %156 = vmatpush1.bf16.msra.mxu0 0
    %157 = vmatprep.subr.bf16.mxu0 0
    %158 = vmatpush1.bf16.msra.mxu0 0
    %159 = vmatprep.subr.bf16.mxu0 0
    %160 = vmatpush1.bf16.msra.mxu0 0
    %161 = vmatprep.subr.bf16.mxu0 0
    %162 = vmatpush1.bf16.msra.mxu0 0
    %163 = vmatprep.subr.bf16.mxu0 0
    %164 = vmatpush1.bf16.msra.mxu0 0
    %165 = vmatprep.subr.bf16.mxu0 0
    %166 = vmatpush1.bf16.msra.mxu0 0
    %167 = vmatprep.mubr.bf16.mxu0 0
    %168 = vmatmul.mubr.bf16.gmra.mrb[0].mxu0 %v80
    %v169 = vpop.f32.mrb[0].mxu0
    %v170 = vadd.f32 0.0, %v169
    %v171 = vpop.f32.mrb[0].mxu0
    %v172 = vpop.f32.mrb[0].mxu0
    %v173 = vpop.f32.mrb[0].mxu0
    %174 = vdwg.mxu0
    %175 = vmax.xlane.f32.xlu0 %v129
    %v176 = vpop.xlane.xlu0 %175
    %v177 = vsub.f32 %v129, %v176
    %v178 = vmul.f32 %v177, 1.442695
    %v179 = vpow.pop %v178
    %180 = vadd.xlane.f32.xlu0 %v179
    %v181 = vpop.xlane.xlu0 %180
    %v182 = vrcp.pop %v181
    %v183 = vmul.f32 %v179, %v182
    %v184 = vadd.f32 %v183, 0.0
    %185 = vmax.xlane.f32.xlu0 %v131
    %v186 = vpop.xlane.xlu0 %185
    %v187 = vsub.f32 %v131, %v186
    %v188 = vmul.f32 %v187, 1.442695
    %v189 = vpow.pop %v188
    %190 = vadd.xlane.f32.xlu0 %v189
    %v191 = vpop.xlane.xlu0 %190
    %v192 = vrcp.pop %v191
    %v193 = vmul.f32 %v189, %v192
    %v194 = vadd.f32 %v184, %v193
    %195 = vmax.xlane.f32.xlu0 %v170
    %v196 = vpop.xlane.xlu0 %195
    %v197 = vsub.f32 %v170, %v196
    %v198 = vmul.f32 %v197, 1.442695
    %v199 = vpow.pop %v198
    %200 = vadd.xlane.f32.xlu0 %v199
    %v201 = vpop.xlane.xlu0 %200
    %v202 = vrcp.pop %v201
    %v203 = vmul.f32 %v199, %v202
    %v204 = vadd.f32 %v194, %v203
    %205 = vst [vmem:[#allocation5] sm:$0xff] %v204
    // Predicated region
    $region14: #{ensemble_avg_forward.1} parent=1 // pred_check
      _
    $region15: #{ensemble_avg_forward.1} parent=1 // pred_check_branch
      %207 = sbr.rel (0) target = $region17
    $region16: #{ensemble_avg_forward.1} parent=1 // pred_region
      %s209 = ssub.s32 128, 128
      %210 = vsyncadd [#allocation4], %s209
      %s212 = sshll.u32 [#allocation5], 4
      %s213 = int_to_ptr.vmem [resolvable:$true] %s212
      %215 = dma.vmem_to_hbm [thread:$0]  %s213, 128, %s2, [#allocation4]
    $region17: #{ensemble_avg_forward.1} parent=1 // pred_fallthru
      _
    // Predicated region
    $region18: #{ensemble_avg_forward.1} parent=1 // pred_check
      _
    $region19: #{ensemble_avg_forward.1} parent=1 // pred_check_branch
      %217 = sbr.rel (0) target = $region21
    $region20: #{ensemble_avg_forward.1} parent=1 // pred_region
      %218 = dma.done [#allocation4], 128
    $region21: #{ensemble_avg_forward.1} parent=1 // pred_fallthru
      _
    %219 = vsyncpa [#allocation3], 1
    %220 = vsyncpa [#allocation4], 1

</llo_original>
